<compile_context>
chip_gen: v7x
topology: tpu7x:2x2x1
jax: 0.10.0
libtpu: 0.0.40
codegen_flags: <defaults>
</compile_context>

<pallas_src>
import jax
import jax.numpy as jnp
from jax.experimental import pallas as pl
from jax.experimental.pallas import tpu as pltpu

INPUT_SIZE = 32      # `input_size = inputs_train.shape[1]` in the original script
H1 = 150
H2 = 75
OUT = 2
EPS = 1e-5           # PyTorch BatchNorm1d default eps

# Lane/sublane-friendly padded sizes.
H1_PAD = 256
H2_PAD = 128
OUT_PAD = 8          # block last dim == full array dim is legal; keeps writeback lean


def _round_up(n, m):
    return ((n + m - 1) // m) * m


# ---------------------------------------------------------------------------
# Kernel: 3 matmuls (bf16 operands, f32 accumulation) + 2 ReLU + sigmoid.
# ---------------------------------------------------------------------------
def ffnn_kernel(x_ref, w1_ref, b1_ref, w2_ref, b2_ref, w3_ref, o_ref):
    x = x_ref[...]                                                   # (tb, 32) bf16

    h = jnp.dot(x, w1_ref[...], preferred_element_type=jnp.float32)  # f32 acc
    h = jnp.maximum(h + b1_ref[...], 0.0)                            # f32 elementwise

    h = jnp.dot(h.astype(jnp.bfloat16), w2_ref[...],
                preferred_element_type=jnp.float32)
    h = jnp.maximum(h + b2_ref[...], 0.0)

    logits = jnp.dot(h.astype(jnp.bfloat16), w3_ref[...],
                     preferred_element_type=jnp.float32)              # (tb, 8)
    o_ref[...] = jax.nn.sigmoid(logits)


# ---------------------------------------------------------------------------
# Wrapper: fold BN + bias into weights, pad, cast, tile the batch, launch.
# ---------------------------------------------------------------------------
def fold_and_pad_params(params):
    (w1, b1, g1, be1, m1, v1,
     w2, b2, g2, be2, m2, v2,
     w3) = params

    s1 = g1 * jax.lax.rsqrt(v1 + EPS)            # (1, H1)
    w1f = w1 * s1                                # (IN, H1)
    b1f = (b1 - m1) * s1 + be1                   # (1, H1)

    s2 = g2 * jax.lax.rsqrt(v2 + EPS)            # (1, H2)
    w2f = w2 * s2                                # (H1, H2)
    b2f = (b2 - m2) * s2 + be2                   # (1, H2)

    # Zero-pad to lane-aligned shapes; zeros propagate harmlessly through ReLU,
    # and padded output columns are sliced off in net_forward.
    w1p = jnp.zeros((INPUT_SIZE, H1_PAD), jnp.bfloat16).at[:, :H1].set(
        w1f.astype(jnp.bfloat16))
    b1p = jnp.zeros((1, H1_PAD), jnp.float32).at[:, :H1].set(b1f)
    w2p = jnp.zeros((H1_PAD, H2_PAD), jnp.bfloat16).at[:H1, :H2].set(
        w2f.astype(jnp.bfloat16))
    b2p = jnp.zeros((1, H2_PAD), jnp.float32).at[:, :H2].set(b2f)
    w3p = jnp.zeros((H2_PAD, OUT_PAD), jnp.bfloat16).at[:H2, :OUT].set(
        w3.astype(jnp.bfloat16))
    return w1p, b1p, w2p, b2p, w3p


def net_forward(x, params, *, tile_b=2048):
    """Forward pass. x: (batch, INPUT_SIZE) f32. Returns (batch, OUT) f32."""
    w1p, b1p, w2p, b2p, w3p = fold_and_pad_params(params)

    batch = x.shape[0]
    # bf16 operands -> pad batch to multiples of 16 (sublane packing).
    b_pad = _round_up(max(batch, 16), 16)
    tb = min(tile_b, b_pad)
    # Ensure >= 2 "parallel" grid steps for non-trivial batches so v7x's two
    # TensorCores both get work (harmless on single-TC chips).
    if b_pad > 16 and pl.cdiv(b_pad, tb) < 2:
        tb = _round_up(pl.cdiv(b_pad, 2), 16)
    b_pad = _round_up(b_pad, tb)
    grid = (b_pad // tb,)

    xb = x.astype(jnp.bfloat16)
    if b_pad != batch:
        xb = jnp.zeros((b_pad, INPUT_SIZE), jnp.bfloat16).at[:batch].set(xb)

    cost = pl.CostEstimate(
        flops=2 * b_pad * (INPUT_SIZE * H1_PAD + H1_PAD * H2_PAD + H2_PAD * OUT_PAD),
        transcendentals=b_pad * OUT_PAD,  # sigmoid
        bytes_accessed=(
            2 * b_pad * INPUT_SIZE                                    # x (bf16)
            + 2 * (INPUT_SIZE * H1_PAD + H1_PAD * H2_PAD + H2_PAD * OUT_PAD)  # weights
            + 4 * (H1_PAD + H2_PAD)                                   # biases (f32)
            + 4 * b_pad * OUT_PAD                                     # output (f32)
        ),
    )

    out_padded = pl.pallas_call(
        ffnn_kernel,
        out_shape=jax.ShapeDtypeStruct((b_pad, OUT_PAD), jnp.float32),
        grid_spec=pltpu.PrefetchScalarGridSpec(
            num_scalar_prefetch=0,
            grid=grid,
            in_specs=[
                pl.BlockSpec((tb, INPUT_SIZE), lambda i: (i, 0)),       # x tile
                pl.BlockSpec((INPUT_SIZE, H1_PAD), lambda i: (0, 0)),   # W1' (resident)
                pl.BlockSpec((1, H1_PAD), lambda i: (0, 0)),            # b1'
                pl.BlockSpec((H1_PAD, H2_PAD), lambda i: (0, 0)),       # W2'
                pl.BlockSpec((1, H2_PAD), lambda i: (0, 0)),            # b2'
                pl.BlockSpec((H2_PAD, OUT_PAD), lambda i: (0, 0)),      # W3
            ],
            out_specs=pl.BlockSpec((tb, OUT_PAD), lambda i: (i, 0)),
        ),
        compiler_params=pltpu.CompilerParams(
            dimension_semantics=("parallel",),
        ),
        cost_estimate=cost,
    )(xb, w1p, b1p, w2p, b2p, w3p)

    return out_padded[:batch, :OUT]


# ---------------------------------------------------------------------------
# Pure-JAX reference (unfolded BN, f32 HIGHEST precision) for correctness check.
# ---------------------------------------------------------------------------
def reference_forward(x, params):
    (w1, b1, g1, be1, m1, v1,
     w2, b2, g2, be2, m2, v2,
     w3) = params
    hp = jax.lax.Precision.HIGHEST
    h = jnp.dot(x, w1, precision=hp) + b1
    h = (h - m1) * (g1 * jax.lax.rsqrt(v1 + EPS)) + be1
    h = jnp.maximum(h, 0.0)
    h = jnp.dot(h, w2, precision=hp) + b2
    h = (h - m2) * (g2 * jax.lax.rsqrt(v2 + EPS)) + be2
    h = jnp.maximum(h, 0.0)
    return jax.nn.sigmoid(jnp.dot(h, w3, precision=hp))


# ---------------------------------------------------------------------------
# Deterministic synthetic parameters matching the PyTorch module's shapes.
# ---------------------------------------------------------------------------
def init_params(key):
    ks = jax.random.split(key, 10)

    def linear_init(kw, kb, fan_in, fan_out, bias=True):
        bound = 1.0 / jnp.sqrt(fan_in)
        w = jax.random.uniform(kw, (fan_in, fan_out), jnp.float32, -bound, bound)
        b = (jax.random.uniform(kb, (1, fan_out), jnp.float32, -bound, bound)
             if bias else None)
        return w, b

    w1, b1 = linear_init(ks[0], ks[1], INPUT_SIZE, H1)
    w2, b2 = linear_init(ks[2], ks[3], H1, H2)
    w3, _ = linear_init(ks[4], ks[5], H2, OUT, bias=False)

    # BatchNorm1d params (gamma, beta) and running stats (mean, var).
    g1 = jnp.ones((1, H1), jnp.float32)
    be1 = jnp.zeros((1, H1), jnp.float32)
    m1 = 0.1 * jax.random.normal(ks[6], (1, H1), jnp.float32)
    v1 = jnp.ones((1, H1), jnp.float32) + 0.05 * jnp.abs(
        jax.random.normal(ks[7], (1, H1), jnp.float32))

    g2 = jnp.ones((1, H2), jnp.float32)
    be2 = jnp.zeros((1, H2), jnp.float32)
    m2 = 0.1 * jax.random.normal(ks[8], (1, H2), jnp.float32)
    v2 = jnp.ones((1, H2), jnp.float32) + 0.05 * jnp.abs(
        jax.random.normal(ks[9], (1, H2), jnp.float32))

    return (w1, b1, g1, be1, m1, v1,
            w2, b2, g2, be2, m2, v2,
            w3)


if __name__ == "__main__":
    key = jax.random.PRNGKey(0)
    k_x, k_p = jax.random.split(key)

    batch = 8
    x = jax.random.normal(k_x, (batch, INPUT_SIZE), jnp.float32)
    params = init_params(k_p)

    out = net_forward(x, params)
    out = jax.block_until_ready(out)

    assert out.shape == (batch, OUT)
    assert bool(jnp.all(jnp.isfinite(out)))
    assert bool(jnp.all((out >= 0.0) & (out <= 1.0)))  # sigmoid range

    # bf16 matmul operands vs f32 HIGHEST reference -> slightly looser tolerance.
    ref = reference_forward(x, params)
    assert bool(jnp.all(jnp.abs(out - ref) < 2e-2)), "mismatch vs reference"

    print("KERNEL_OK")
</pallas_src>

<mosaic_0001>
module attributes {stable_mosaic.version = 11 : i64} {
  func.func @ffnn_kernel(%arg0: i32, %arg1: memref<16x32xbf16, #tpu.memory_space<vmem>>, %arg2: memref<32x256xbf16, #tpu.memory_space<vmem>>, %arg3: memref<1x256xf32, #tpu.memory_space<vmem>>, %arg4: memref<256x128xbf16, #tpu.memory_space<vmem>>, %arg5: memref<1x128xf32, #tpu.memory_space<vmem>>, %arg6: memref<128x8xbf16, #tpu.memory_space<vmem>>, %arg7: memref<16x8xf32, #tpu.memory_space<vmem>>) attributes {dimension_semantics = [#tpu.dimension_semantics<parallel>], iteration_bounds = array<i64: 1>, scalar_prefetch = 0 : i64, scratch_operands = 0 : i64, tpu.core_type = #tpu.core_type<tc>, window_params = [{transform_indices = @transform_0, window_bounds = array<i64: 16, 32>}, {pipeline_mode = #tpu.pipeline_mode<synchronous>, transform_indices = @transform_1, window_bounds = array<i64: 32, 256>}, {pipeline_mode = #tpu.pipeline_mode<synchronous>, transform_indices = @transform_2, window_bounds = array<i64: 1, 256>}, {pipeline_mode = #tpu.pipeline_mode<synchronous>, transform_indices = @transform_3, window_bounds = array<i64: 256, 128>}, {pipeline_mode = #tpu.pipeline_mode<synchronous>, transform_indices = @transform_4, window_bounds = array<i64: 1, 128>}, {pipeline_mode = #tpu.pipeline_mode<synchronous>, transform_indices = @transform_5, window_bounds = array<i64: 128, 8>}, {transform_indices = @transform_6, window_bounds = array<i64: 16, 8>}]} {
    %c0 = arith.constant 0 : index
    %c0_0 = arith.constant 0 : index
    %0 = vector.load %arg1[%c0, %c0_0] : memref<16x32xbf16, #tpu.memory_space<vmem>>, vector<16x32xbf16>
    %c0_1 = arith.constant 0 : index
    %c0_2 = arith.constant 0 : index
    %1 = vector.load %arg2[%c0_1, %c0_2] : memref<32x256xbf16, #tpu.memory_space<vmem>>, vector<32x256xbf16>
    %cst = arith.constant dense<0.000000e+00> : vector<16x256xf32>
    %2 = tpu.matmul %0, %1, %cst {dimension_numbers = #tpu.dot_dimension_numbers<[1], [0], [0], [1], [0, 0, 1, 1], [], []>} : vector<16x32xbf16>, vector<32x256xbf16>, vector<16x256xf32> -> vector<16x256xf32>
    %c0_3 = arith.constant 0 : index
    %c0_4 = arith.constant 0 : index
    %3 = vector.load %arg3[%c0_3, %c0_4] : memref<1x256xf32, #tpu.memory_space<vmem>>, vector<1x256xf32>
    %4 = vector.broadcast %3 : vector<1x256xf32> to vector<16x256xf32>
    %5 = arith.addf %2, %4 : vector<16x256xf32>
    %cst_5 = arith.constant 0.000000e+00 : f32
    %6 = vector.broadcast %cst_5 : f32 to vector<16x256xf32>
    %7 = arith.maximumf %5, %6 : vector<16x256xf32>
    %8 = arith.truncf %7 : vector<16x256xf32> to vector<16x256xbf16>
    %c0_6 = arith.constant 0 : index
    %c0_7 = arith.constant 0 : index
    %9 = vector.load %arg4[%c0_6, %c0_7] : memref<256x128xbf16, #tpu.memory_space<vmem>>, vector<256x128xbf16>
    %cst_8 = arith.constant dense<0.000000e+00> : vector<16x128xf32>
    %10 = tpu.matmul %8, %9, %cst_8 {dimension_numbers = #tpu.dot_dimension_numbers<[1], [0], [0], [1], [0, 0, 1, 1], [], []>} : vector<16x256xbf16>, vector<256x128xbf16>, vector<16x128xf32> -> vector<16x128xf32>
    %c0_9 = arith.constant 0 : index
    %c0_10 = arith.constant 0 : index
    %11 = vector.load %arg5[%c0_9, %c0_10] : memref<1x128xf32, #tpu.memory_space<vmem>>, vector<1x128xf32>
    %12 = vector.broadcast %11 : vector<1x128xf32> to vector<16x128xf32>
    %13 = arith.addf %10, %12 : vector<16x128xf32>
    %cst_11 = arith.constant 0.000000e+00 : f32
    %14 = vector.broadcast %cst_11 : f32 to vector<16x128xf32>
    %15 = arith.maximumf %13, %14 : vector<16x128xf32>
    %16 = arith.truncf %15 : vector<16x128xf32> to vector<16x128xbf16>
    %c0_12 = arith.constant 0 : index
    %c0_13 = arith.constant 0 : index
    %17 = vector.load %arg6[%c0_12, %c0_13] : memref<128x8xbf16, #tpu.memory_space<vmem>>, vector<128x8xbf16>
    %cst_14 = arith.constant dense<0.000000e+00> : vector<16x8xf32>
    %18 = tpu.matmul %16, %17, %cst_14 {dimension_numbers = #tpu.dot_dimension_numbers<[1], [0], [0], [1], [0, 0, 1, 1], [], []>} : vector<16x128xbf16>, vector<128x8xbf16>, vector<16x8xf32> -> vector<16x8xf32>
    %19 = arith.negf %18 : vector<16x8xf32>
    %20 = math.exp %19 : vector<16x8xf32>
    %cst_15 = arith.constant 1.000000e+00 : f32
    %21 = vector.broadcast %cst_15 : f32 to vector<16x8xf32>
    %22 = arith.addf %21, %20 : vector<16x8xf32>
    %23 = arith.divf %21, %22 : vector<16x8xf32>
    %c0_16 = arith.constant 0 : index
    %c0_17 = arith.constant 0 : index
    %24 = vector.load %arg7[%c0_16, %c0_17] : memref<16x8xf32, #tpu.memory_space<vmem>>, vector<16x8xf32>
    tpu.vector_store %arg7[%c0_16, %c0_17], %23 {strides = array<i32>} : memref<16x8xf32, #tpu.memory_space<vmem>>, vector<16x8xf32>,
    return
  }
  func.func @transform_0(%arg0: i32) -> (i32, i32) {
    %c0_i32 = arith.constant 0 : i32
    %c0_i32_0 = arith.constant 0 : i32
    return %arg0, %c0_i32 : i32, i32
  }
  func.func @transform_1(%arg0: i32) -> (i32, i32) {
    %c0_i32 = arith.constant 0 : i32
    %c0_i32_0 = arith.constant 0 : i32
    %c0_i32_1 = arith.constant 0 : i32
    return %c0_i32, %c0_i32_0 : i32, i32
  }
  func.func @transform_2(%arg0: i32) -> (i32, i32) {
    %c0_i32 = arith.constant 0 : i32
    %c0_i32_0 = arith.constant 0 : i32
    %c0_i32_1 = arith.constant 0 : i32
    return %c0_i32, %c0_i32_0 : i32, i32
  }
  func.func @transform_3(%arg0: i32) -> (i32, i32) {
    %c0_i32 = arith.constant 0 : i32
    %c0_i32_0 = arith.constant 0 : i32
    %c0_i32_1 = arith.constant 0 : i32
    return %c0_i32, %c0_i32_0 : i32, i32
  }
  func.func @transform_4(%arg0: i32) -> (i32, i32) {
    %c0_i32 = arith.constant 0 : i32
    %c0_i32_0 = arith.constant 0 : i32
    %c0_i32_1 = arith.constant 0 : i32
    return %c0_i32, %c0_i32_0 : i32, i32
  }
  func.func @transform_5(%arg0: i32) -> (i32, i32) {
    %c0_i32 = arith.constant 0 : i32
    %c0_i32_0 = arith.constant 0 : i32
    %c0_i32_1 = arith.constant 0 : i32
    return %c0_i32, %c0_i32_0 : i32, i32
  }
  func.func @transform_6(%arg0: i32) -> (i32, i32) {
    %c0_i32 = arith.constant 0 : i32
    %c0_i32_0 = arith.constant 0 : i32
    return %arg0, %c0_i32 : i32, i32
  }
}

</mosaic_0001>

<llo_original>
// kernel: tpu_custom_call.1
$region0: #{tpu_custom_call.1}
  #allocation0 [shape = 'u32[]', space=smem, size = 0x4, offset = 0x4, fixed_abs, tag = 'smem constant byte address 0x4 - core index']
  #allocation1 [shape = 'u32[144,128]{1,0:T(1,128)}', space=vmem, size = 0x12000, scoped, tag = 'internal scratch']
  %s0 = inlined_call_operand.vmem [shape: bf16[16,32], index: 0, kind: input, shape index: {}]
  %s1 = inlined_call_operand.vmem [shape: bf16[32,256], index: 1, kind: input, shape index: {}]
  %s2 = inlined_call_operand.vmem [shape: f32[1,256], index: 2, kind: input, shape index: {}]
  %s3 = inlined_call_operand.hbm [shape: bf16[256,128], index: 3, kind: input, shape index: {}]
  %s4 = inlined_call_operand.vmem [shape: f32[1,128], index: 4, kind: input, shape index: {}]
  %s5 = inlined_call_operand.vmem [shape: bf16[128,8], index: 5, kind: input, shape index: {}]
  %s6 = inlined_call_operand.vmem [shape: f32[16,8], index: 6, kind: output, shape index: {}]
  %s7 = sld [smem:[#allocation0]]
  $region38: #{tpu_custom_call.1} parent=0
    _
  %s9 = ssub.s32 1, %s7
  %s10 = scalar_select 0, %s9, %s7
  $region1: #{tpu_custom_call.1} parent=0
    #allocation2 [shape = 'u8[65536]{0}', space=vmem, size = 0x10000, scoped, tag = 'input window, operand 3, single buffered']
    #allocation3 [shape = 's32[1]{0}', space=sflag, size = 0x4, scoped, tag = 'scoped memory for tpu_custom_call.1']
    %11 = vsyncpa [#allocation3], 0
    // Predicated region
    $region2: #{tpu_custom_call.1} parent=1 // pred_check
      _
    $region3: #{tpu_custom_call.1} parent=1 // pred_check_branch
      %13 = sbr.rel (0) target = $region5
    $region4: #{tpu_custom_call.1} parent=1 // pred_region
      _
    $region5: #{tpu_custom_call.1} parent=1 // pred_fallthru
      _
    // Predicated region
    $region6: #{tpu_custom_call.1} parent=1 // pred_check
      _
    $region7: #{tpu_custom_call.1} parent=1 // pred_check_branch
      %15 = sbr.rel (0) target = $region9
    $region8: #{tpu_custom_call.1} parent=1 // pred_region
      _
    $region9: #{tpu_custom_call.1} parent=1 // pred_fallthru
      _
    // Predicated region
    $region10: #{tpu_custom_call.1} parent=1 // pred_check
      _
    $region11: #{tpu_custom_call.1} parent=1 // pred_check_branch
      %17 = sbr.rel (0) target = $region13
    $region12: #{tpu_custom_call.1} parent=1 // pred_region
      _
    $region13: #{tpu_custom_call.1} parent=1 // pred_fallthru
      _
    // Predicated region
    $region14: #{tpu_custom_call.1} parent=1 // pred_check
      _
    $region15: #{tpu_custom_call.1} parent=1 // pred_check_branch
      %19 = sbr.rel (0) target = $region17
    $region16: #{tpu_custom_call.1} parent=1 // pred_region
      %s21 = ssub.s32 2048, 2048
      %22 = vsyncadd [#allocation3], %s21
      %s23 = sshll.u32 [#allocation2], 4
      %s24 = int_to_ptr.vmem [resolvable:$true] %s23
      %29 = dma.hbm_to_vmem [thread:$0]  %s3, 2048, %s24, [#allocation3], 64, 64, 4
    $region17: #{tpu_custom_call.1} parent=1 // pred_fallthru
      _
    // Predicated region
    $region18: #{tpu_custom_call.1} parent=1 // pred_check
      _
    $region19: #{tpu_custom_call.1} parent=1 // pred_check_branch
      %31 = sbr.rel (0) target = $region21
    $region20: #{tpu_custom_call.1} parent=1 // pred_region
      _
    $region21: #{tpu_custom_call.1} parent=1 // pred_fallthru
      _
    // Predicated region
    $region22: #{tpu_custom_call.1} parent=1 // pred_check
      _
    $region23: #{tpu_custom_call.1} parent=1 // pred_check_branch
      %33 = sbr.rel (0) target = $region25
    $region24: #{tpu_custom_call.1} parent=1 // pred_region
      _
    $region25: #{tpu_custom_call.1} parent=1 // pred_fallthru
      _
    // Predicated region
    $region26: #{tpu_custom_call.1} parent=1 // pred_check
      _
    $region27: #{tpu_custom_call.1} parent=1 // pred_check_branch
      %35 = sbr.rel (0) target = $region29
    $region28: #{tpu_custom_call.1} parent=1 // pred_region
      %36 = dma.done [#allocation3], 2048
    $region29: #{tpu_custom_call.1} parent=1 // pred_fallthru
      _
    %v38 = vld [vmem:[%s0] sm:$0xf]
    %v39 = vld [vmem:[%s0 + $0x4] sm:$0xf]
    %v40 = vld [vmem:[%s1] sm:$0xff]
    %v41 = vld [vmem:[%s1 + $0x8] sm:$0xff]
    %v42 = vld [vmem:[%s1 + $0x10] sm:$0xff]
    %v43 = vld [vmem:[%s1 + $0x18] sm:$0xff]
    %v44 = vld [vmem:[%s2] sm:$0x3]
    %v46 = vlaneseq
    %v47 = vshrl.u32 %v46, 7
    %v48 = vsub.s32 0, %v47
    %v49 = vrot.slane %v44, %v48
    %v50 = vlaneseq
    %v51 = vshrl.u32 %v50, 7
    %v52 = vsub.s32 1, %v51
    %v53 = vrot.slane %v44, %v52
    %v58 = vunpack.c.l.b16 %v38
    %v59 = vunpack.c.l.b16 %v39
    %v60 = vpack.c.b16 %v59, %v58
    %v65 = vunpack.c.l.b16 %v40
    %v66 = vunpack.c.h.b16 %v40
    %v67 = vunpack.c.l.b16 %v41
    %v68 = vunpack.c.h.b16 %v41
    %v69 = vunpack.c.l.b16 %v42
    %v70 = vunpack.c.h.b16 %v42
    %v71 = vunpack.c.l.b16 %v43
    %v72 = vunpack.c.h.b16 %v43
    %v73 = vpack.c.b16 %v67, %v65
    %v74 = vpack.c.b16 %v68, %v66
    %v75 = vpack.c.b16 %v71, %v69
    %v76 = vpack.c.b16 %v72, %v70
    %vm81 = vcmask 261120
    %v83 = vsel %vm81, %v60, 0
    %85 = vmatprep.subr.bf16.mxu0 %v74
    %86 = vmatpush1.bf16.msra.mxu0 %v73
    %87 = vmatprep.subr.bf16.mxu0 %v76
    %88 = vmatpush1.bf16.msra.mxu0 %v75
    %89 = vmatprep.subr.bf16.mxu0 0
    %90 = vmatpush1.bf16.msra.mxu0 0
    %91 = vmatprep.subr.bf16.mxu0 0
    %92 = vmatpush1.bf16.msra.mxu0 0
    %93 = vmatprep.subr.bf16.mxu0 0
    %94 = vmatpush1.bf16.msra.mxu0 0
    %95 = vmatprep.subr.bf16.mxu0 0
    %96 = vmatpush1.bf16.msra.mxu0 0
    %97 = vmatprep.subr.bf16.mxu0 0
    %98 = vmatpush1.bf16.msra.mxu0 0
    %99 = vmatprep.subr.bf16.mxu0 0
    %100 = vmatpush1.bf16.msra.mxu0 0
    %101 = vmatprep.subr.bf16.mxu0 0
    %102 = vmatpush1.bf16.msra.mxu0 0
    %103 = vmatprep.subr.bf16.mxu0 0
    %104 = vmatpush1.bf16.msra.mxu0 0
    %105 = vmatprep.subr.bf16.mxu0 0
    %106 = vmatpush1.bf16.msra.mxu0 0
    %107 = vmatprep.subr.bf16.mxu0 0
    %108 = vmatpush1.bf16.msra.mxu0 0
    %109 = vmatprep.subr.bf16.mxu0 0
    %110 = vmatpush1.bf16.msra.mxu0 0
    %111 = vmatprep.subr.bf16.mxu0 0
    %112 = vmatpush1.bf16.msra.mxu0 0
    %113 = vmatprep.subr.bf16.mxu0 0
    %114 = vmatpush1.bf16.msra.mxu0 0
    %115 = vmatprep.subr.bf16.mxu0 0
    %116 = vmatpush1.bf16.msra.mxu0 0
    %117 = vmatprep.mubr.bf16.mxu0 0
    %118 = vmatmul.mubr.bf16.gmra.mrb[0].mxu0 %v83
    %v119 = vpop.f32.mrb[0].mxu0
    %v120 = vadd.f32 %v49, %v119
    %v121 = vpop.f32.mrb[0].mxu0
    %v122 = vadd.f32 %v53, %v121
    %v123 = vpop.f32.mrb[0].mxu0
    %v124 = vadd.f32 %v49, %v123
    %v125 = vpop.f32.mrb[0].mxu0
    %v126 = vadd.f32 %v53, %v125
    %127 = vdwg.mxu0
    %v128 = vmax.f32 %v120, 0.0
    %v129 = vmax.f32 %v122, 0.0
    %v130 = vmax.f32 %v124, 0.0
    %v131 = vmax.f32 %v126, 0.0
    %v132 = vpack.c.bf16 %v130, %v128
    %v133 = vpack.c.bf16 %v131, %v129
    %v134 = vld [vmem:[#allocation2] sm:$0xf]
    %v135 = vld [vmem:[#allocation2 + $0x4] sm:$0xf]
    %v136 = vld [vmem:[#allocation2 + $0x8] sm:$0xf]
    %v137 = vld [vmem:[#allocation2 + $0xc] sm:$0xf]
    %v138 = vld [vmem:[#allocation2 + $0x10] sm:$0xf]
    %v139 = vld [vmem:[#allocation2 + $0x14] sm:$0xf]
    %v140 = vld [vmem:[#allocation2 + $0x18] sm:$0xf]
    %v141 = vld [vmem:[#allocation2 + $0x1c] sm:$0xf]
    %v142 = vld [vmem:[#allocation2 + $0x20] sm:$0xf]
    %v143 = vld [vmem:[#allocation2 + $0x24] sm:$0xf]
    %v144 = vld [vmem:[#allocation2 + $0x28] sm:$0xf]
    %v145 = vld [vmem:[#allocation2 + $0x2c] sm:$0xf]
    %v146 = vld [vmem:[#allocation2 + $0x30] sm:$0xf]
    %v147 = vld [vmem:[#allocation2 + $0x34] sm:$0xf]
    %v148 = vld [vmem:[#allocation2 + $0x38] sm:$0xf]
    %v149 = vld [vmem:[#allocation2 + $0x3c] sm:$0xf]
    %v150 = vld [vmem:[#allocation2 + $0x40] sm:$0xf]
    %v151 = vld [vmem:[#allocation2 + $0x44] sm:$0xf]
    %v152 = vld [vmem:[#allocation2 + $0x48] sm:$0xf]
    %v153 = vld [vmem:[#allocation2 + $0x4c] sm:$0xf]
    %v154 = vld [vmem:[#allocation2 + $0x50] sm:$0xf]
    %v155 = vld [vmem:[#allocation2 + $0x54] sm:$0xf]
    %v156 = vld [vmem:[#allocation2 + $0x58] sm:$0xf]
    %v157 = vld [vmem:[#allocation2 + $0x5c] sm:$0xf]
    %v158 = vld [vmem:[#allocation2 + $0x60] sm:$0xf]
    %v159 = vld [vmem:[#allocation2 + $0x64] sm:$0xf]
    %v160 = vld [vmem:[#allocation2 + $0x68] sm:$0xf]
    %v161 = vld [vmem:[#allocation2 + $0x6c] sm:$0xf]
    %v162 = vld [vmem:[#allocation2 + $0x70] sm:$0xf]
    %v163 = vld [vmem:[#allocation2 + $0x74] sm:$0xf]
    %v164 = vld [vmem:[#allocation2 + $0x78] sm:$0xf]
    %v165 = vld [vmem:[#allocation2 + $0x7c] sm:$0xf]
    %v166 = vld [vmem:[%s4] sm:$0x1]
    %v168 = vlaneseq
    %v169 = vshrl.u32 %v168, 7
    %v170 = vsub.s32 0, %v169
    %v171 = vrot.slane %v166, %v170
    %v205 = vunpack.c.l.b16 %v134
    %v206 = vunpack.c.l.b16 %v135
    %v207 = vunpack.c.l.b16 %v136
    %v208 = vunpack.c.l.b16 %v137
    %v209 = vunpack.c.l.b16 %v138
    %v210 = vunpack.c.l.b16 %v139
    %v211 = vunpack.c.l.b16 %v140
    %v212 = vunpack.c.l.b16 %v141
    %v213 = vunpack.c.l.b16 %v142
    %v214 = vunpack.c.l.b16 %v143
    %v215 = vunpack.c.l.b16 %v144
    %v216 = vunpack.c.l.b16 %v145
    %v217 = vunpack.c.l.b16 %v146
    %v218 = vunpack.c.l.b16 %v147
    %v219 = vunpack.c.l.b16 %v148
    %v220 = vunpack.c.l.b16 %v149
    %v221 = vunpack.c.l.b16 %v150
    %v222 = vunpack.c.l.b16 %v151
    %v223 = vunpack.c.l.b16 %v152
    %v224 = vunpack.c.l.b16 %v153
    %v225 = vunpack.c.l.b16 %v154
    %v226 = vunpack.c.l.b16 %v155
    %v227 = vunpack.c.l.b16 %v156
    %v228 = vunpack.c.l.b16 %v157
    %v229 = vunpack.c.l.b16 %v158
    %v230 = vunpack.c.l.b16 %v159
    %v231 = vunpack.c.l.b16 %v160
    %v232 = vunpack.c.l.b16 %v161
    %v233 = vunpack.c.l.b16 %v162
    %v234 = vunpack.c.l.b16 %v163
    %v235 = vunpack.c.l.b16 %v164
    %v236 = vunpack.c.l.b16 %v165
    %v237 = vpack.c.b16 %v206, %v205
    %v238 = vpack.c.b16 %v208, %v207
    %v239 = vpack.c.b16 %v210, %v209
    %v240 = vpack.c.b16 %v212, %v211
    %v241 = vpack.c.b16 %v214, %v213
    %v242 = vpack.c.b16 %v216, %v215
    %v243 = vpack.c.b16 %v218, %v217
    %v244 = vpack.c.b16 %v220, %v219
    %v245 = vpack.c.b16 %v222, %v221
    %v246 = vpack.c.b16 %v224, %v223
    %v247 = vpack.c.b16 %v226, %v225
    %v248 = vpack.c.b16 %v228, %v227
    %v249 = vpack.c.b16 %v230, %v229
    %v250 = vpack.c.b16 %v232, %v231
    %v251 = vpack.c.b16 %v234, %v233
    %v252 = vpack.c.b16 %v236, %v235
    %269 = vmatprep.subr.bf16.mxu0 0
    %270 = vmatpush1.bf16.msra.mxu0 %v237
    %271 = vmatprep.subr.bf16.mxu0 0
    %272 = vmatpush1.bf16.msra.mxu0 %v238
    %273 = vmatprep.subr.bf16.mxu0 0
    %274 = vmatpush1.bf16.msra.mxu0 %v239
    %275 = vmatprep.subr.bf16.mxu0 0
    %276 = vmatpush1.bf16.msra.mxu0 %v240
    %277 = vmatprep.subr.bf16.mxu0 0
    %278 = vmatpush1.bf16.msra.mxu0 %v241
    %279 = vmatprep.subr.bf16.mxu0 0
    %280 = vmatpush1.bf16.msra.mxu0 %v242
    %281 = vmatprep.subr.bf16.mxu0 0
    %282 = vmatpush1.bf16.msra.mxu0 %v243
    %283 = vmatprep.subr.bf16.mxu0 0
    %284 = vmatpush1.bf16.msra.mxu0 %v244
    %285 = vmatprep.subr.bf16.mxu0 0
    %286 = vmatpush1.bf16.msra.mxu0 %v245
    %287 = vmatprep.subr.bf16.mxu0 0
    %288 = vmatpush1.bf16.msra.mxu0 %v246
    %289 = vmatprep.subr.bf16.mxu0 0
    %290 = vmatpush1.bf16.msra.mxu0 %v247
    %291 = vmatprep.subr.bf16.mxu0 0
    %292 = vmatpush1.bf16.msra.mxu0 %v248
    %293 = vmatprep.subr.bf16.mxu0 0
    %294 = vmatpush1.bf16.msra.mxu0 %v249
    %295 = vmatprep.subr.bf16.mxu0 0
    %296 = vmatpush1.bf16.msra.mxu0 %v250
    %297 = vmatprep.subr.bf16.mxu0 0
    %298 = vmatpush1.bf16.msra.mxu0 %v251
    %299 = vmatprep.subr.bf16.mxu0 0
    %300 = vmatpush1.bf16.msra.mxu0 %v252
    %301 = vmatprep.mubr.bf16.mxu0 %v133
    %302 = vmatmul.mubr.bf16.gmra.mrb[0].mxu0 %v132
    %v303 = vpop.f32.mrb[0].mxu0
    %v304 = vadd.f32 %v171, %v303
    %v305 = vpop.f32.mrb[0].mxu0
    %v306 = vpop.f32.mrb[0].mxu0
    %v307 = vadd.f32 %v171, %v306
    %v308 = vpop.f32.mrb[0].mxu0
    %309 = vdwg.mxu0
    %v310 = vmax.f32 %v304, 0.0
    %v311 = vmax.f32 %v307, 0.0
    %v312 = vpack.c.bf16 %v311, %v310
    %v313 = vld [vmem:[%s5] sm:$0xf]
    %v314 = vld [vmem:[%s5 + $0x4] sm:$0xf]
    %v315 = vld [vmem:[%s5 + $0x8] sm:$0xf]
    %v316 = vld [vmem:[%s5 + $0xc] sm:$0xf]
    %v317 = vld [vmem:[%s5 + $0x10] sm:$0xf]
    %v318 = vld [vmem:[%s5 + $0x14] sm:$0xf]
    %v319 = vld [vmem:[%s5 + $0x18] sm:$0xf]
    %v320 = vld [vmem:[%s5 + $0x1c] sm:$0xf]
    %v321 = vld [vmem:[%s5 + $0x20] sm:$0xf]
    %v322 = vld [vmem:[%s5 + $0x24] sm:$0xf]
    %v323 = vld [vmem:[%s5 + $0x28] sm:$0xf]
    %v324 = vld [vmem:[%s5 + $0x2c] sm:$0xf]
    %v325 = vld [vmem:[%s5 + $0x30] sm:$0xf]
    %v326 = vld [vmem:[%s5 + $0x34] sm:$0xf]
    %v327 = vld [vmem:[%s5 + $0x38] sm:$0xf]
    %v328 = vld [vmem:[%s5 + $0x3c] sm:$0xf]
    %v345 = vunpack.c.l.b16 %v313
    %v346 = vunpack.c.l.b16 %v314
    %v347 = vunpack.c.l.b16 %v315
    %v348 = vunpack.c.l.b16 %v316
    %v349 = vunpack.c.l.b16 %v317
    %v350 = vunpack.c.l.b16 %v318
    %v351 = vunpack.c.l.b16 %v319
    %v352 = vunpack.c.l.b16 %v320
    %v353 = vunpack.c.l.b16 %v321
    %v354 = vunpack.c.l.b16 %v322
    %v355 = vunpack.c.l.b16 %v323
    %v356 = vunpack.c.l.b16 %v324
    %v357 = vunpack.c.l.b16 %v325
    %v358 = vunpack.c.l.b16 %v326
    %v359 = vunpack.c.l.b16 %v327
    %v360 = vunpack.c.l.b16 %v328
    %v361 = vpack.c.b16 %v346, %v345
    %v362 = vpack.c.b16 %v348, %v347
    %v363 = vpack.c.b16 %v350, %v349
    %v364 = vpack.c.b16 %v352, %v351
    %v365 = vpack.c.b16 %v354, %v353
    %v366 = vpack.c.b16 %v356, %v355
    %v367 = vpack.c.b16 %v358, %v357
    %v368 = vpack.c.b16 %v360, %v359
    %377 = vmatprep.subr.bf16.mxu0 0
    %378 = vmatpush1.bf16.msra.mxu0 %v361
    %379 = vmatprep.subr.bf16.mxu0 0
    %380 = vmatpush1.bf16.msra.mxu0 %v362
    %381 = vmatprep.subr.bf16.mxu0 0
    %382 = vmatpush1.bf16.msra.mxu0 %v363
    %383 = vmatprep.subr.bf16.mxu0 0
    %384 = vmatpush1.bf16.msra.mxu0 %v364
    %385 = vmatprep.subr.bf16.mxu0 0
    %386 = vmatpush1.bf16.msra.mxu0 %v365
    %387 = vmatprep.subr.bf16.mxu0 0
    %388 = vmatpush1.bf16.msra.mxu0 %v366
    %389 = vmatprep.subr.bf16.mxu0 0
    %390 = vmatpush1.bf16.msra.mxu0 %v367
    %391 = vmatprep.subr.bf16.mxu0 0
    %392 = vmatpush1.bf16.msra.mxu0 %v368
    %393 = vmatprep.subr.bf16.mxu0 0
    %394 = vmatpush1.bf16.msra.mxu0 0
    %395 = vmatprep.subr.bf16.mxu0 0
    %396 = vmatpush1.bf16.msra.mxu0 0
    %397 = vmatprep.subr.bf16.mxu0 0
    %398 = vmatpush1.bf16.msra.mxu0 0
    %399 = vmatprep.subr.bf16.mxu0 0
    %400 = vmatpush1.bf16.msra.mxu0 0
    %401 = vmatprep.subr.bf16.mxu0 0
    %402 = vmatpush1.bf16.msra.mxu0 0
    %403 = vmatprep.subr.bf16.mxu0 0
    %404 = vmatpush1.bf16.msra.mxu0 0
    %405 = vmatprep.subr.bf16.mxu0 0
    %406 = vmatpush1.bf16.msra.mxu0 0
    %407 = vmatprep.subr.bf16.mxu0 0
    %408 = vmatpush1.bf16.msra.mxu0 0
    %409 = vmatprep.mubr.bf16.mxu0 0
    %410 = vmatmul.mubr.bf16.gmra.mrb[0].mxu0 %v312
    %v411 = vpop.f32.mrb[0].mxu0
    %v412 = vadd.f32 0.0, %v411
    %v413 = vpop.f32.mrb[0].mxu0
    %v414 = vpop.f32.mrb[0].mxu0
    %v415 = vadd.f32 0.0, %v414
    %v416 = vpop.f32.mrb[0].mxu0
    %417 = vdwg.mxu0
    %v418 = vxor.u32 %v412, 2147483648
    %v419 = vxor.u32 %v415, 2147483648
    %v420 = vmul.f32 %v418, 1.442695
    %v421 = vpow.pop %v420
    %v422 = vmul.f32 %v419, 1.442695
    %v423 = vpow.pop %v422
    %v424 = vadd.f32 %v421, 1.0
    %v425 = vadd.f32 %v423, 1.0
    %v426 = vrcp.pop %v424
    %v427 = vmul.f32 1.0, %v426
    %v428 = vrcp.pop %v425
    %v429 = vmul.f32 1.0, %v428
    %vm430 = vcmask 64512
    %431 = vst.msk [vmem:[%s6] sm:$0xff] %vm430, %v427
    %432 = vst.msk [vmem:[%s6 + $0x8] sm:$0xff] %vm430, %v429
    // Predicated region
    $region30: #{tpu_custom_call.1} parent=1 // pred_check
      _
    $region31: #{tpu_custom_call.1} parent=1 // pred_check_branch
      %434 = sbr.rel (0) target = $region33
    $region32: #{tpu_custom_call.1} parent=1 // pred_region
      _
    $region33: #{tpu_custom_call.1} parent=1 // pred_fallthru
      _
    // Predicated region
    $region34: #{tpu_custom_call.1} parent=1 // pred_check
      _
    $region35: #{tpu_custom_call.1} parent=1 // pred_check_branch
      %436 = sbr.rel (0) target = $region37
    $region36: #{tpu_custom_call.1} parent=1 // pred_region
      _
    $region37: #{tpu_custom_call.1} parent=1 // pred_fallthru
      _
    %437 = vsyncpa [#allocation3], 1

</llo_original>
